<compile_context>
chip_gen: v6e
topology: v6e:2x2x1
jax: 0.10.0
libtpu: 0.0.40
codegen_flags: <defaults>
</compile_context>

<pallas_src>
import functools

import jax
import jax.numpy as jnp
from jax.experimental import pallas as pl
from jax.experimental.pallas import tpu as pltpu


def _kd_loss_kernel(x_ref, t_ref, o_ref, *, alpha, c_t):
    """x_ref: (1, C_in, T), t_ref: (1, C_t, T), o_ref: (1, 1, T).

    Channels live on the sublane axis, pixels on the lane axis. Computes the
    per-pixel mean over channels of log_softmax(x[:, :C_t]) * softmax(alpha*t).
    """
    # narrow(1, 0, C_t) as a static in-kernel slice (no wrapper HBM copy).
    x = x_ref[:, :c_t, :].astype(jnp.float32)
    t = t_ref[...].astype(jnp.float32) * jnp.float32(alpha)

    # log-softmax pieces over the channel (sublane) axis.
    x_max = jnp.max(x, axis=1, keepdims=True)
    x_sh = x - x_max
    lse = jnp.log(jnp.sum(jnp.exp(x_sh), axis=1, keepdims=True))

    # softmax(alpha * targets) pieces.
    t_max = jnp.max(t, axis=1, keepdims=True)
    t_exp = jnp.exp(t - t_max)
    sum_t = jnp.sum(t_exp, axis=1, keepdims=True)

    # mean_c((x_sh - lse) * t_exp / sum_t)
    #   = (sum_c(x_sh * t_exp) - lse * sum_t) / (C_t * sum_t)
    num = jnp.sum(x_sh * t_exp, axis=1, keepdims=True) - lse * sum_t
    o_ref[...] = num * pl.reciprocal(sum_t * jnp.float32(c_t))  # exact recip


def _round_up(x, m):
    return (x + m - 1) // m * m


def _choose_tile_hw(hw, c_in, c_t, target_bytes=2 << 20, lane_cap=32768):
    """Pick the pixel-tile (lane) size.

    Aims for ~target_bytes per input block so DMA hides the per-grid-step
    overhead, while total VMEM (2 inputs x 2 pipeline buffers + output) stays
    well under the v7x 64 MiB / default 32 MiB scoped limit.
    Returns (tile_hw, padded_hw)."""
    bytes_per_pixel = max(c_in, c_t) * 4  # f32 working precision
    cap = (target_bytes // bytes_per_pixel) // 128 * 128
    cap = max(128, min(lane_cap, cap))
    if hw <= cap:
        return hw, hw                      # single full-width block (any hw)
    for t in range(cap, 127, -128):        # largest 128-multiple divisor of hw
        if hw % t == 0:
            return t, hw
    return cap, _round_up(hw, cap)         # fall back: pad the pixel axis


def knowledge_distillation_loss(inputs, targets, mask=None,
                                reduction="mean", alpha=1.0):
    """inputs: (N, C_in, H, W) NCHW; targets: (N, C_t, H, W), C_t <= C_in."""
    N, C_in, H, W = inputs.shape
    C_t = targets.shape[1]
    HW = H * W

    # Free reshapes of contiguous NCHW -- no transpose, no extra HBM traffic.
    x = inputs.reshape(N, C_in, HW)
    t = targets.reshape(N, C_t, HW)

    tile_hw, hw_pad = _choose_tile_hw(HW, C_in, C_t)
    if hw_pad != HW:
        pad = hw_pad - HW
        x = jnp.pad(x, ((0, 0), (0, 0), (0, pad)))
        t = jnp.pad(t, ((0, 0), (0, 0), (0, pad)))

    kernel = functools.partial(_kd_loss_kernel, alpha=float(alpha), c_t=C_t)
    loss = pl.pallas_call(
        kernel,
        out_shape=jax.ShapeDtypeStruct((N, 1, hw_pad), jnp.float32),
        grid_spec=pltpu.PrefetchScalarGridSpec(
            num_scalar_prefetch=0,
            grid=(N, hw_pad // tile_hw),
            in_specs=[
                pl.BlockSpec((1, C_in, tile_hw), lambda n, j: (n, 0, j)),
                pl.BlockSpec((1, C_t, tile_hw), lambda n, j: (n, 0, j)),
            ],
            out_specs=pl.BlockSpec((1, 1, tile_hw), lambda n, j: (n, 0, j)),
        ),
        compiler_params=pltpu.CompilerParams(
            dimension_semantics=("parallel", "parallel")),
    )(x, t)

    loss = loss[:, 0, :HW].reshape(N, H, W)  # matches torch loss shape (N,H,W)

    if mask is not None:
        loss = loss * mask.astype(jnp.float32)

    if reduction == "mean":
        return -jnp.mean(loss)
    elif reduction == "sum":
        return -jnp.sum(loss)
    else:
        return -loss


def _reference(inputs, targets, mask=None, reduction="mean", alpha=1.0):
    C_t = targets.shape[1]
    x = inputs[:, :C_t]
    log_probs = jax.nn.log_softmax(x, axis=1)
    labels = jax.nn.softmax(targets * alpha, axis=1)
    loss = jnp.mean(log_probs * labels, axis=1)
    if mask is not None:
        loss = loss * mask.astype(jnp.float32)
    if reduction == "mean":
        return -jnp.mean(loss)
    elif reduction == "sum":
        return -jnp.sum(loss)
    return -loss


if __name__ == "__main__":
    key = jax.random.PRNGKey(0)
    k1, k2, k3 = jax.random.split(key, 3)

    # Primary shape: batch=2, C_in=6 narrowed to C_t=4, spatial 16x16.
    N, C_in, C_t, H, W = 2, 6, 4, 16, 16
    inputs = jax.random.normal(k1, (N, C_in, H, W), dtype=jnp.float32)
    targets = jax.random.normal(k2, (N, C_t, H, W), dtype=jnp.float32)

    out = knowledge_distillation_loss(inputs, targets, mask=None,
                                      reduction="mean", alpha=1.0)
    out = jax.block_until_ready(out)
    ref = _reference(inputs, targets, mask=None, reduction="mean", alpha=1.0)
    assert jnp.allclose(out, ref, atol=1e-5, rtol=1e-5), (out, ref)

    # 'none' reduction with a mask.
    mask = jax.random.uniform(k3, (N, H, W)) > 0.5
    out2 = knowledge_distillation_loss(inputs, targets, mask=mask,
                                       reduction="none", alpha=1.0)
    out2 = jax.block_until_ready(out2)
    ref2 = _reference(inputs, targets, mask=mask, reduction="none", alpha=1.0)
    assert jnp.allclose(out2, ref2, atol=1e-5, rtol=1e-5)

    # Odd spatial size (H*W not a multiple of 128), alpha != 1, reduction=sum:
    # exercises the no-assert / full-width-block path.
    H2, W2 = 10, 12
    inp2 = jax.random.normal(k1, (N, C_in, H2, W2), dtype=jnp.float32)
    tgt2 = jax.random.normal(k2, (N, C_t, H2, W2), dtype=jnp.float32)
    out3 = knowledge_distillation_loss(inp2, tgt2, mask=None,
                                       reduction="sum", alpha=0.75)
    out3 = jax.block_until_ready(out3)
    ref3 = _reference(inp2, tgt2, mask=None, reduction="sum", alpha=0.75)
    assert jnp.allclose(out3, ref3, atol=1e-5, rtol=1e-5), (out3, ref3)

    print("KERNEL_OK")
</pallas_src>

<mosaic_0001>
module attributes {stable_mosaic.version = 11 : i64} {
  func.func @_kd_loss_kernel(%arg0: i32, %arg1: i32, %arg2: memref<1x6x256xf32, #tpu.memory_space<vmem>>, %arg3: memref<1x4x256xf32, #tpu.memory_space<vmem>>, %arg4: memref<1x1x256xf32, #tpu.memory_space<vmem>>) attributes {dimension_semantics = [#tpu.dimension_semantics<parallel>, #tpu.dimension_semantics<parallel>], iteration_bounds = array<i64: 2, 1>, scalar_prefetch = 0 : i64, scratch_operands = 0 : i64, tpu.core_type = #tpu.core_type<tc>, window_params = [{transform_indices = @transform_0, window_bounds = array<i64: 1, 6, 256>}, {transform_indices = @transform_1, window_bounds = array<i64: 1, 4, 256>}, {transform_indices = @transform_2, window_bounds = array<i64: 1, 1, 256>}]} {
    %c0 = arith.constant 0 : index
    %c0_0 = arith.constant 0 : index
    %c0_1 = arith.constant 0 : index
    %0 = vector.load %arg2[%c0, %c0_0, %c0_1] : memref<1x6x256xf32, #tpu.memory_space<vmem>>, vector<1x4x256xf32>
    %c0_2 = arith.constant 0 : index
    %c0_3 = arith.constant 0 : index
    %c0_4 = arith.constant 0 : index
    %1 = vector.load %arg3[%c0_2, %c0_3, %c0_4] : memref<1x4x256xf32, #tpu.memory_space<vmem>>, vector<1x4x256xf32>
    %cst = arith.constant 1.000000e+00 : f32
    %2 = vector.broadcast %cst : f32 to vector<1x4x256xf32>
    %3 = arith.mulf %1, %2 : vector<1x4x256xf32>
    %cst_5 = arith.constant dense<0xFF800000> : vector<1x256xf32>
    %4 = vector.multi_reduction <maximumf>, %0, %cst_5 [1] : vector<1x4x256xf32> to vector<1x256xf32>
    %5 = vector.shape_cast %4 : vector<1x256xf32> to vector<1x1x256xf32>
    %6 = vector.broadcast %5 : vector<1x1x256xf32> to vector<1x4x256xf32>
    %7 = arith.subf %0, %6 : vector<1x4x256xf32>
    %8 = math.exp %7 : vector<1x4x256xf32>
    %cst_6 = arith.constant dense<0.000000e+00> : vector<1x256xf32>
    %9 = vector.multi_reduction <add>, %8, %cst_6 [1] : vector<1x4x256xf32> to vector<1x256xf32>
    %10 = vector.shape_cast %9 : vector<1x256xf32> to vector<1x1x256xf32>
    %11 = math.log %10 : vector<1x1x256xf32>
    %cst_7 = arith.constant dense<0xFF800000> : vector<1x256xf32>
    %12 = vector.multi_reduction <maximumf>, %3, %cst_7 [1] : vector<1x4x256xf32> to vector<1x256xf32>
    %13 = vector.shape_cast %12 : vector<1x256xf32> to vector<1x1x256xf32>
    %14 = vector.broadcast %13 : vector<1x1x256xf32> to vector<1x4x256xf32>
    %15 = arith.subf %3, %14 : vector<1x4x256xf32>
    %16 = math.exp %15 : vector<1x4x256xf32>
    %cst_8 = arith.constant dense<0.000000e+00> : vector<1x256xf32>
    %17 = vector.multi_reduction <add>, %16, %cst_8 [1] : vector<1x4x256xf32> to vector<1x256xf32>
    %18 = vector.shape_cast %17 : vector<1x256xf32> to vector<1x1x256xf32>
    %19 = arith.mulf %7, %16 : vector<1x4x256xf32>
    %cst_9 = arith.constant dense<0.000000e+00> : vector<1x256xf32>
    %20 = vector.multi_reduction <add>, %19, %cst_9 [1] : vector<1x4x256xf32> to vector<1x256xf32>
    %21 = vector.shape_cast %20 : vector<1x256xf32> to vector<1x1x256xf32>
    %22 = arith.mulf %11, %18 : vector<1x1x256xf32>
    %23 = arith.subf %21, %22 : vector<1x1x256xf32>
    %cst_10 = arith.constant 4.000000e+00 : f32
    %24 = vector.broadcast %cst_10 : f32 to vector<1x1x256xf32>
    %25 = arith.mulf %18, %24 : vector<1x1x256xf32>
    %26 = tpu.reciprocal %25 : vector<1x1x256xf32> -> vector<1x1x256xf32>
    %27 = arith.mulf %23, %26 : vector<1x1x256xf32>
    %c0_11 = arith.constant 0 : index
    %c0_12 = arith.constant 0 : index
    %c0_13 = arith.constant 0 : index
    %28 = vector.load %arg4[%c0_11, %c0_12, %c0_13] : memref<1x1x256xf32, #tpu.memory_space<vmem>>, vector<1x1x256xf32>
    tpu.vector_store %arg4[%c0_11, %c0_12, %c0_13], %27 {strides = array<i32>} : memref<1x1x256xf32, #tpu.memory_space<vmem>>, vector<1x1x256xf32>,
    return
  }
  func.func @transform_0(%arg0: i32, %arg1: i32) -> (i32, i32, i32) {
    %c0_i32 = arith.constant 0 : i32
    %c0_i32_0 = arith.constant 0 : i32
    return %arg0, %c0_i32, %arg1 : i32, i32, i32
  }
  func.func @transform_1(%arg0: i32, %arg1: i32) -> (i32, i32, i32) {
    %c0_i32 = arith.constant 0 : i32
    %c0_i32_0 = arith.constant 0 : i32
    return %arg0, %c0_i32, %arg1 : i32, i32, i32
  }
  func.func @transform_2(%arg0: i32, %arg1: i32) -> (i32, i32, i32) {
    %c0_i32 = arith.constant 0 : i32
    %c0_i32_0 = arith.constant 0 : i32
    return %arg0, %c0_i32, %arg1 : i32, i32, i32
  }
}

</mosaic_0001>

<llo_original>
// kernel: tpu_custom_call.1
$region0: #{tpu_custom_call.1}
  #allocation0 [shape = 'u32[]', space=smem, size = 0x4, offset = 0x4, fixed_abs, tag = 'smem constant byte address 0x4 - core index']
  #allocation1 [shape = 'u32[144,128]{1,0:T(1,128)}', space=vmem, size = 0x12000, scoped, tag = 'internal scratch']
  %s0 = inlined_call_operand.vmem [shape: f32[2,6,256], index: 0, kind: input, shape index: {}]
  %s1 = inlined_call_operand.vmem [shape: f32[2,4,256], index: 1, kind: input, shape index: {}]
  %s2 = inlined_call_operand.hbm [shape: f32[2,1,256], index: 2, kind: output, shape index: {}]
  %s3 = sld [smem:[#allocation0]]
  $region41: #{tpu_custom_call.1} parent=0
    _
  %s5 = ssub.s32 1, %s3
  %s6 = scalar_select 0, %s5, %s3
  $region1: #{tpu_custom_call.1} parent=0
    #allocation2 [shape = 'u8[2048]{0}', space=vmem, size = 0x800, scoped, tag = 'output window, operand 0']
    #allocation3 [shape = 's32[2]{0}', space=sflag, size = 0x8, scoped, tag = 'scoped memory for tpu_custom_call.1']
    %7 = vsyncpa [#allocation3], 0
    %s8 = scalar_lea.sflag [#allocation3], 1
    %9 = vsyncpa %s8, 0
    loop: start=0, step=1, limit=4
    $region2: #{tpu_custom_call.1} parent=1 // loop_pre_header
      _
    $region3: #{tpu_custom_call.1} parent=1 // loop_header
      %s11 = sphi 0, %s15
      %p12 = scmp.ge.s32.totalorder %s11, 4
      %s18 = sphi 0, %s30
      %s19 = sphi 0, %s26
      %s20 = sphi 0, %s18
      %s21 = sphi 0, %s19
      %s22 = sphi 0, %s20
      %s23 = sphi 0, %s21
      %s35 = sphi 0, %s37
      %s38 = sphi 0, %s35
      %s39 = sphi 0, %s38
      %s55 = sphi 0, %s39
      %s63 = sphi 0, %s65
      %s66 = sphi 0, %s63
      %s67 = sphi 0, %s66
      %s83 = sphi 0, %s67
      %s91 = sphi 0, %s93
      %s94 = sphi 0, %s91
      %s95 = sphi 0, %s94
      %s111 = sphi 0, %s95
    $region4: #{tpu_custom_call.1} parent=1 // loop_header_branch
      %14 = sbr.rel (%p12) target = $region8
    $region5: #{tpu_custom_call.1} parent=1 // loop_body
      %s16 = ssub.s32 %s11, 1
      %s17 = ssub.s32 %s11, 2
      %s24 = sadd.s32 1, %s19
      %p25 = scmp.ge.s32.totalorder %s24, 1
      %s26 = scalar_select %p25, 0, %s24
      %s27 = sadd.s32 1, %s18
      %s28 = scalar_select %p25, %s27, %s18
      %p29 = scmp.ge.s32.totalorder %s28, 2
      %s30 = scalar_select %p29, 0, %s28
      %s31 = ssub.s32 %s18, %s30
      %s32 = ssub.s32 %s19, %s26
      %s33 = sor.u32 %s31, %s32
      %p34 = scmp.eq.s32.totalorder %s33, 0
      %s36 = sadd.s32 %s35, 1
      %s37 = scalar_select %p34, %s35, %s36
      %p40 = pneg %p34
      %p41 = scmp.eq.s32.totalorder %s11, 1
      %p42 = por %p40, %p41
      %p43 = scmp.ne.s32.totalorder %s35, %s38
      %p44 = scmp.eq.s32.totalorder %s11, 0
      %p45 = por %p43, %p44
      %p46 = scmp.ne.s32.totalorder %s35, %s38
      %p47 = scmp.eq.s32.totalorder %s16, 1
      %p48 = por %p46, %p47
      %p49 = scmp.ne.s32.totalorder %s38, %s39
      %p50 = scmp.eq.s32.totalorder %s16, 0
      %p51 = por %p49, %p50
      %p52 = scmp.ne.s32.totalorder %s38, %s39
      %p53 = scmp.eq.s32.totalorder %s17, 1
      %p54 = por %p52, %p53
      %p56 = scmp.ne.s32.totalorder %s39, %s55
      %p57 = scmp.eq.s32.totalorder %s17, 0
      %p58 = por %p56, %p57
      %s59 = ssub.s32 %s18, %s30
      %s60 = ssub.s32 %s19, %s26
      %s61 = sor.u32 %s59, %s60
      %p62 = scmp.eq.s32.totalorder %s61, 0
      %s64 = sadd.s32 %s63, 1
      %s65 = scalar_select %p62, %s63, %s64
      %p68 = pneg %p62
      %p69 = scmp.eq.s32.totalorder %s11, 1
      %p70 = por %p68, %p69
      %p71 = scmp.ne.s32.totalorder %s63, %s66
      %p72 = scmp.eq.s32.totalorder %s11, 0
      %p73 = por %p71, %p72
      %p74 = scmp.ne.s32.totalorder %s63, %s66
      %p75 = scmp.eq.s32.totalorder %s16, 1
      %p76 = por %p74, %p75
      %p77 = scmp.ne.s32.totalorder %s66, %s67
      %p78 = scmp.eq.s32.totalorder %s16, 0
      %p79 = por %p77, %p78
      %p80 = scmp.ne.s32.totalorder %s66, %s67
      %p81 = scmp.eq.s32.totalorder %s17, 1
      %p82 = por %p80, %p81
      %p84 = scmp.ne.s32.totalorder %s67, %s83
      %p85 = scmp.eq.s32.totalorder %s17, 0
      %p86 = por %p84, %p85
      %s87 = ssub.s32 %s18, %s30
      %s88 = ssub.s32 %s19, %s26
      %s89 = sor.u32 %s87, %s88
      %p90 = scmp.eq.s32.totalorder %s89, 0
      %s92 = sadd.s32 %s91, 1
      %s93 = scalar_select %p90, %s91, %s92
      %p96 = pneg %p90
      %p97 = scmp.eq.s32.totalorder %s11, 1
      %p98 = por %p96, %p97
      %p99 = scmp.ne.s32.totalorder %s91, %s94
      %p100 = scmp.eq.s32.totalorder %s11, 0
      %p101 = por %p99, %p100
      %p102 = scmp.ne.s32.totalorder %s91, %s94
      %p103 = scmp.eq.s32.totalorder %s16, 1
      %p104 = por %p102, %p103
      %p105 = scmp.ne.s32.totalorder %s94, %s95
      %p106 = scmp.eq.s32.totalorder %s16, 0
      %p107 = por %p105, %p106
      %p108 = scmp.ne.s32.totalorder %s94, %s95
      %p109 = scmp.eq.s32.totalorder %s17, 1
      %p110 = por %p108, %p109
      %p112 = scmp.ne.s32.totalorder %s95, %s111
      %p113 = scmp.eq.s32.totalorder %s17, 0
      %p114 = por %p112, %p113
      %p115 = scmp.le.s32.totalorder 1, %s11
      %p116 = scmp.lt.s32.totalorder %s11, 3
      %p117 = pnand %p115, %p116
      %p118 = pneg %p117
      // Predicated region
      $region9: #{tpu_custom_call.1} parent=5 // pred_check
        _
      $region10: #{tpu_custom_call.1} parent=5 // pred_check_branch
        %120 = sbr.rel (%p117) target = $region12
      $region11: #{tpu_custom_call.1} parent=5 // pred_region
        %s121 = ssub.s32 %s11, 1
      $region12: #{tpu_custom_call.1} parent=5 // pred_fallthru
        _
      %p122 = scmp.lt.s32.totalorder %s11, 2
      // Predicated region
      $region13: #{tpu_custom_call.1} parent=5 // pred_check
        %p123 = pneg %p122
      $region14: #{tpu_custom_call.1} parent=5 // pred_check_branch
        %125 = sbr.rel (%p123) target = $region16
      $region15: #{tpu_custom_call.1} parent=5 // pred_region
        // Predicated region
        $region17: #{tpu_custom_call.1} parent=15 // pred_check
          %p126 = pneg %p45
        $region18: #{tpu_custom_call.1} parent=15 // pred_check_branch
          %128 = sbr.rel (%p126) target = $region20
        $region19: #{tpu_custom_call.1} parent=15 // pred_region
          %s129 = smul.u32 2, %s19
          %p130 = scmp.lt.s32.totalorder %s18, 1
          %s131 = scalar_select %p130, %s18, 1
          %p132 = scmp.lt.s32.totalorder %s129, 1
          %s133 = scalar_select %p132, %s129, 1
          %s134 = smul.addr %s131, 2
          %s135 = sadd.s32 %s133, %s134
          %s136 = smul.addr %s135, 8
          %s137 = scalar_lea.vmem %s0, %s136
          %s138 = smul.u32 2, %s19
        $region20: #{tpu_custom_call.1} parent=15 // pred_fallthru
          _
        // Predicated region
        $region21: #{tpu_custom_call.1} parent=15 // pred_check
          %p139 = pneg %p73
        $region22: #{tpu_custom_call.1} parent=15 // pred_check_branch
          %141 = sbr.rel (%p139) target = $region24
        $region23: #{tpu_custom_call.1} parent=15 // pred_region
          %s142 = smul.u32 2, %s19
          %p143 = scmp.lt.s32.totalorder %s18, 1
          %s144 = scalar_select %p143, %s18, 1
          %p145 = scmp.lt.s32.totalorder %s142, 1
          %s146 = scalar_select %p145, %s142, 1
          %s147 = smul.addr %s144, 2
          %s148 = sadd.s32 %s146, %s147
          %s149 = smul.addr %s148, 4
          %s150 = scalar_lea.vmem %s1, %s149
          %s151 = smul.u32 2, %s19
        $region24: #{tpu_custom_call.1} parent=15 // pred_fallthru
          _
      $region16: #{tpu_custom_call.1} parent=5 // pred_fallthru
        _
      %p152 = scmp.le.s32.totalorder 1, %s11
      %p153 = scmp.lt.s32.totalorder %s11, 3
      %p154 = pnand %p152, %p153
      %p155 = pneg %p154
      // Predicated region
      $region25: #{tpu_custom_call.1} parent=5 // pred_check
        _
      $region26: #{tpu_custom_call.1} parent=5 // pred_check_branch
        %157 = sbr.rel (%p154) target = $region28
      $region27: #{tpu_custom_call.1} parent=5 // pred_region
        %s158 = ssub.s32 %s11, 1
        %s159 = smul.u32 2, %s21
        %p160 = scmp.lt.s32.totalorder %s20, 1
        %s161 = scalar_select %p160, %s20, 1
        %p162 = scmp.lt.s32.totalorder %s159, 1
        %s163 = scalar_select %p162, %s159, 1
        %s164 = smul.addr %s161, 2
        %s165 = sadd.s32 %s163, %s164
        %s166 = smul.addr %s165, 8
        %s167 = scalar_lea.vmem %s0, %s166
        %p168 = pneg %p51
        %p169 = pneg %p48
        %s170 = smul.u32 2, %s21
        %p171 = scmp.lt.s32.totalorder %s20, 1
        %s172 = scalar_select %p171, %s20, 1
        %p173 = scmp.lt.s32.totalorder %s170, 1
        %s174 = scalar_select %p173, %s170, 1
        %s175 = smul.addr %s172, 2
        %s176 = sadd.s32 %s174, %s175
        %s177 = smul.addr %s176, 4
        %s178 = scalar_lea.vmem %s1, %s177
        %p179 = pneg %p79
        %p180 = pneg %p76
        %p181 = pneg %p107
        %p182 = pneg %p104
        %s183 = sand.u32 %s94, 1
        %s184 = scalar_lea.sflag [#allocation3], %s183
        %s185 = sand.u32 %s94, 1
        %s186 = smul.addr %s185, 2
        %s187 = scalar_lea.vmem [#allocation2], %s186
        %s188 = smul.u32 2, %s21
        %p189 = scmp.lt.s32.totalorder %s20, 1
        %s190 = scalar_select %p189, %s20, 1
        %p191 = scmp.lt.s32.totalorder %s188, 1
        %s192 = scalar_select %p191, %s188, 1
        %s193 = smul.addr %s190, 2
        %s194 = sadd.s32 %s192, %s193
        %s195 = smul.addr %s194, 8
        %s196 = scalar_lea.vmem %s0, %s195
        %s197 = smul.u32 2, %s21
        %s198 = smul.u32 2, %s21
        %p199 = scmp.lt.s32.totalorder %s20, 1
        %s200 = scalar_select %p199, %s20, 1
        %p201 = scmp.lt.s32.totalorder %s198, 1
        %s202 = scalar_select %p201, %s198, 1
        %s203 = smul.addr %s200, 2
        %s204 = sadd.s32 %s202, %s203
        %s205 = smul.addr %s204, 4
        %s206 = scalar_lea.vmem %s1, %s205
        %s207 = smul.u32 2, %s21
        %s208 = smul.u32 2, %s21
        %v209 = vld [vmem:[%s196] sm:$0xf]
        %v210 = vld [vmem:[%s196 + $0x8] sm:$0xf]
        %v211 = vld [vmem:[%s206] sm:$0xff]
        %vm212 = vcmask 1043456
        %v213 = vsel %vm212, %v209, -inf
        %v214 = vrot.slane %v213, 4
        %v215 = vmax.f32 %v213, %v214
        %v216 = vrot.slane %v215, 2
        %v217 = vmax.f32 %v215, %v216
        %v218 = vrot.slane %v217, 1
        %v219 = vmax.f32 %v217, %v218
        %v220 = vsel %vm212, %v210, -inf
        %v221 = vrot.slane %v220, 4
        %v222 = vmax.f32 %v220, %v221
        %v223 = vrot.slane %v222, 2
        %v224 = vmax.f32 %v222, %v223
        %v225 = vrot.slane %v224, 1
        %v226 = vmax.f32 %v224, %v225
        %v227 = vsub.f32 %v209, %v219
        %v228 = vsub.f32 %v210, %v226
        %v229 = vmul.f32 %v227, 1.442695
        %v230 = vpow.pop %v229
        %v231 = vmul.f32 %v228, 1.442695
        %v232 = vpow.pop %v231
        %v233 = vsel %vm212, %v230, 0.0
        %v234 = vrot.slane %v233, 4
        %v235 = vadd.f32 %v233, %v234
        %v236 = vrot.slane %v235, 2
        %v237 = vadd.f32 %v235, %v236
        %v238 = vrot.slane %v237, 1
        %v239 = vadd.f32 %v237, %v238
        %v240 = vsel %vm212, %v232, 0.0
        %v241 = vrot.slane %v240, 4
        %v242 = vadd.f32 %v240, %v241
        %v243 = vrot.slane %v242, 2
        %v244 = vadd.f32 %v242, %v243
        %v245 = vrot.slane %v244, 1
        %v246 = vadd.f32 %v244, %v245
        %v247 = vlog2.pop %v239
        %v248 = vmul.f32 %v247, 0.6931472
        %v249 = vlog2.pop %v246
        %v250 = vmul.f32 %v249, 0.6931472
        %v252 = vcombine.high %v211, %v211
        %v254 = vsel %vm212, %v211, -inf
        %v255 = vrot.slane %v254, 4
        %v256 = vmax.f32 %v254, %v255
        %v257 = vrot.slane %v256, 2
        %v258 = vmax.f32 %v256, %v257
        %v259 = vrot.slane %v258, 1
        %v260 = vmax.f32 %v258, %v259
        %v261 = vsel %vm212, %v252, -inf
        %v262 = vrot.slane %v261, 4
        %v263 = vmax.f32 %v261, %v262
        %v264 = vrot.slane %v263, 2
        %v265 = vmax.f32 %v263, %v264
        %v266 = vrot.slane %v265, 1
        %v267 = vmax.f32 %v265, %v266
        %v270 = vcombine.low %v260, %v267
        %v272 = vsub.f32 %v211, %v270
        %v273 = vmul.f32 %v272, 1.442695
        %v274 = vpow.pop %v273
        %v276 = vcombine.high %v274, %v274
        %v278 = vsel %vm212, %v274, 0.0
        %v279 = vrot.slane %v278, 4
        %v280 = vadd.f32 %v278, %v279
        %v281 = vrot.slane %v280, 2
        %v282 = vadd.f32 %v280, %v281
        %v283 = vrot.slane %v282, 1
        %v284 = vadd.f32 %v282, %v283
        %v285 = vsel %vm212, %v276, 0.0
        %v286 = vrot.slane %v285, 4
        %v287 = vadd.f32 %v285, %v286
        %v288 = vrot.slane %v287, 2
        %v289 = vadd.f32 %v287, %v288
        %v290 = vrot.slane %v289, 1
        %v291 = vadd.f32 %v289, %v290
        %v292 = vmul.f32 %v227, %v274
        %v293 = vmul.f32 %v228, %v276
        %v294 = vsel %vm212, %v292, 0.0
        %v295 = vrot.slane %v294, 4
        %v296 = vadd.f32 %v294, %v295
        %v297 = vrot.slane %v296, 2
        %v298 = vadd.f32 %v296, %v297
        %v299 = vrot.slane %v298, 1
        %v300 = vadd.f32 %v298, %v299
        %v301 = vsel %vm212, %v293, 0.0
        %v302 = vrot.slane %v301, 4
        %v303 = vadd.f32 %v301, %v302
        %v304 = vrot.slane %v303, 2
        %v305 = vadd.f32 %v303, %v304
        %v306 = vrot.slane %v305, 1
        %v307 = vadd.f32 %v305, %v306
        %v308 = vmul.f32 %v248, %v284
        %v309 = vmul.f32 %v250, %v291
        %v310 = vsub.f32 %v300, %v308
        %v311 = vsub.f32 %v307, %v309
        %v312 = vmul.f32 %v284, 4.0
        %v313 = vmul.f32 %v291, 4.0
        %v314 = vrcp.pop %v312
        %v315 = vrcp.pop %v313
        %v316 = vmul.f32 %v310, %v314
        %v317 = vmul.f32 %v311, %v315
        %v320 = vcombine.low %v316, %v317
        %v322 = vunpack.c.l.s4 1966171168
        %v323 = vunpack.c.0.s8 %v322
        %v324 = vlaneseq
        %v325 = vshrl.u32 %v324, 7
        %v326 = vsub.s32 %v323, %v325
        %v327 = vrot.slane %v320, %v326
        %v329 = vunpack.c.l.s4 1966171168
        %v330 = vunpack.c.0.s8 %v329
        %v331 = vlaneseq
        %v332 = vshrl.u32 %v331, 7
        %v333 = vsub.s32 %v330, %v332
        %v334 = vrot.slane %v327, %v333
        %v336 = vlaneseq
        %vm337 = vcmp.ge.s32.totalorder %v336, 0
        %vm338 = vcmp.lt.s32.totalorder %v336, 256
        %vm339 = vmand %vm337, %vm338
        %340 = vst.msk [vmem:[%s187] sm:$0x3] %vm339, %v334
        %s341 = sand.u32 %s94, 1
        %s342 = scalar_lea.sflag [#allocation3], %s341
        %s343 = sand.u32 %s94, 1
        %s344 = smul.addr %s343, 2
        %s345 = scalar_lea.vmem [#allocation2], %s344
        // Predicated region
        $region29: #{tpu_custom_call.1} parent=27 // pred_check
          %p346 = pneg %p104
        $region30: #{tpu_custom_call.1} parent=27 // pred_check_branch
          %348 = sbr.rel (%p346) target = $region32
        $region31: #{tpu_custom_call.1} parent=27 // pred_region
          %s349 = smul.u32 2, %s21
          %s351 = ssub.s32 32, 32
          %352 = vsyncadd %s342, %s351
          %s353 = smul.addr %s20, 2
          %s354 = sadd.s32 %s349, %s353
          %s355 = smul.addr %s354, 16
          %s356 = scalar_lea.hbm %s2, %s355
          %s358 = sshll.u32 %s345, 4
          %s359 = int_to_ptr.vmem [resolvable:$true] %s358
          %361 = dma.vmem_to_hbm [thread:$0]  %s359, 32, %s356, %s342
        $region32: #{tpu_custom_call.1} parent=27 // pred_fallthru
          _
      $region28: #{tpu_custom_call.1} parent=5 // pred_fallthru
        _
      %p362 = scmp.le.s32.totalorder 2, %s11
      // Predicated region
      $region33: #{tpu_custom_call.1} parent=5 // pred_check
        %p363 = pneg %p362
      $region34: #{tpu_custom_call.1} parent=5 // pred_check_branch
        %365 = sbr.rel (%p363) target = $region36
      $region35: #{tpu_custom_call.1} parent=5 // pred_region
        %s366 = ssub.s32 %s11, 2
        // Predicated region
        $region37: #{tpu_custom_call.1} parent=35 // pred_check
          %p367 = pneg %p110
        $region38: #{tpu_custom_call.1} parent=35 // pred_check_branch
          %369 = sbr.rel (%p367) target = $region40
        $region39: #{tpu_custom_call.1} parent=35 // pred_region
          %s370 = sand.u32 %s95, 1
          %s371 = scalar_lea.sflag [#allocation3], %s370
          %s372 = sand.u32 %s95, 1
          %s373 = smul.addr %s372, 2
          %s374 = scalar_lea.vmem [#allocation2], %s373
          %375 = dma.done %s371, 32
        $region40: #{tpu_custom_call.1} parent=35 // pred_fallthru
          _
      $region36: #{tpu_custom_call.1} parent=5 // pred_fallthru
        _
    $region6: #{tpu_custom_call.1} parent=1 // loop_footer
      %s15 = sadd.s32 1, %s11
    $region7: #{tpu_custom_call.1} parent=1 // loop_footer_branch
      %10 = sbr.rel target = $region3
    $region8: #{tpu_custom_call.1} parent=1 // loop_exit
      _
    %376 = vsyncpa [#allocation3], 1
    %s377 = scalar_lea.sflag [#allocation3], 1
    %378 = vsyncpa %s377, 1

</llo_original>
